<compile_context>
chip_gen: v5e
topology: v5e:2x2
jax: 0.10.0
libtpu: 0.0.40
codegen_flags: <defaults>
</compile_context>

<pallas_src>
import jax
import jax.numpy as jnp
from jax.experimental import pallas as pl
from jax.experimental.pallas import tpu as pltpu

INPUT_SIZE = 8
HIDDEN_SIZE = 64
H_PAD = 128   # lane-dense hidden width (multiple of 128 lanes)
B_PAD = 8     # sublane-dense batch (multiple of 8 sublanes)


# ---------------------------------------------------------------------------
# Single-step cell (matches the PyTorch module's forward).
# ---------------------------------------------------------------------------
def rnn_cell_kernel(x_ref, h_ref, w_ih_ref, w_hh_ref, b_ref, o_ref):
    ih = jnp.dot(x_ref[...], w_ih_ref[...], preferred_element_type=jnp.float32)
    hh = jnp.dot(h_ref[...], w_hh_ref[...], preferred_element_type=jnp.float32)
    o_ref[...] = jnp.tanh(ih + hh + b_ref[...]).astype(o_ref.dtype)


def pad_params(w_ih, w_hh, b_ih, b_hh):
    """Zero-pad hidden dim 64 -> 128 lanes; fold the two biases.

    W_hh is padded on rows AND columns and the folded bias on padded lanes is
    exactly 0, so padded hidden lanes remain identically 0 in the recurrence.
    """
    _, H = w_ih.shape
    w_ih_p = jnp.pad(w_ih, ((0, 0), (0, H_PAD - H)))            # (In, H_PAD)
    w_hh_p = jnp.pad(w_hh, ((0, H_PAD - H), (0, H_PAD - H)))    # (H_PAD, H_PAD)
    b_p = jnp.pad(b_ih + b_hh, ((0, 0), (0, H_PAD - H)))        # (1, H_PAD)
    return w_ih_p, w_hh_p, b_p


def rnn_cell(x, h, w_ih_p, w_hh_p, b_p):
    """x:(B,In), h:(B,H) -> (B,H). Grid-less call, everything VMEM-resident."""
    B, _ = x.shape
    H = h.shape[1]
    x_p = jnp.pad(x, ((0, B_PAD - B), (0, 0)))                  # (B_PAD, In)
    h_p = jnp.pad(h, ((0, B_PAD - B), (0, H_PAD - H)))          # (B_PAD, H_PAD)
    vmem = lambda: pl.BlockSpec(memory_space=pltpu.MemorySpace.VMEM)
    out = pl.pallas_call(
        rnn_cell_kernel,
        out_shape=jax.ShapeDtypeStruct((B_PAD, H_PAD), jnp.float32),
        in_specs=[vmem()] * 5,
        out_specs=vmem(),
    )(x_p, h_p, w_ih_p, w_hh_p, b_p)
    # Slice back to the module's (B, H) only at the boundary; stores inside the
    # kernel were fully lane/sublane-dense.
    return out[:B, :H]


# ---------------------------------------------------------------------------
# Sequence version: T cell steps fused into ONE grid-less pallas_call.
# Prologue hoists the input projection + bias out of the serial recurrence;
# the time loop is a static unroll over VMEM-resident state.
# ---------------------------------------------------------------------------
def rnn_seq_kernel(x_ref, h0_ref, w_ih_ref, w_hh_ref, b_ref, o_ref,
                   h_scr, ih_scr):
    # Prologue: IH_all = x_seq @ W_ih + (b_ih + b_hh), one lane-dense matmul,
    # completely off the recurrent critical path. Bias broadcast happens once.
    ih_scr[...] = (
        jnp.dot(x_ref[...], w_ih_ref[...], preferred_element_type=jnp.float32)
        + b_ref[...])
    h_scr[...] = h0_ref[...]

    T = o_ref.shape[0]
    # Static unroll (T is small): per-step work is one (B_PAD,128)@(128,128)
    # MXU push, a VPU add and an EUP tanh. No per-step grid/DMA overhead.
    for t in range(T):
        hh = jnp.dot(h_scr[...], w_hh_ref[...],
                     preferred_element_type=jnp.float32)
        h_new = jnp.tanh(ih_scr[pl.ds(t * B_PAD, B_PAD), :] + hh)
        h_scr[...] = h_new
        o_ref[t] = h_new.astype(o_ref.dtype)


def rnn_sequence(x_seq, h0, w_ih_p, w_hh_p, b_p):
    """x_seq:(T,B,In), h0:(B,H) -> (T,B,H); T fused steps, one kernel launch."""
    T, B, In = x_seq.shape
    H = h0.shape[1]
    # Pad batch to 8 sublanes and flatten (T, B_PAD) so the prologue projection
    # is a single (T*B_PAD, In) @ (In, H_PAD) matmul (no in-kernel reshape).
    x_p = jnp.pad(x_seq, ((0, 0), (0, B_PAD - B), (0, 0)))
    x_p = x_p.reshape(T * B_PAD, In)
    h0_p = jnp.pad(h0, ((0, B_PAD - B), (0, H_PAD - H)))
    vmem = lambda: pl.BlockSpec(memory_space=pltpu.MemorySpace.VMEM)
    out = pl.pallas_call(
        rnn_seq_kernel,
        out_shape=jax.ShapeDtypeStruct((T, B_PAD, H_PAD), jnp.float32),
        in_specs=[vmem()] * 5,
        out_specs=vmem(),
        scratch_shapes=[
            pltpu.VMEM((B_PAD, H_PAD), jnp.float32),        # h_t carry
            pltpu.VMEM((T * B_PAD, H_PAD), jnp.float32),    # hoisted IH_all
        ],
    )(x_p, h0_p, w_ih_p, w_hh_p, b_p)
    return out[:, :B, :H]


# ---------------------------------------------------------------------------
# Parameter init mimicking nn.Linear's U(-1/sqrt(fan_in), 1/sqrt(fan_in)).
# Weights stored pre-transposed as (in_features, out_features).
# ---------------------------------------------------------------------------
def init_params(key, input_size, hidden_size):
    k1, k2, k3, k4 = jax.random.split(key, 4)
    bound_ih = 1.0 / jnp.sqrt(jnp.float32(input_size))
    bound_hh = 1.0 / jnp.sqrt(jnp.float32(hidden_size))
    w_ih = jax.random.uniform(k1, (input_size, hidden_size), jnp.float32,
                              -bound_ih, bound_ih)
    b_ih = jax.random.uniform(k2, (1, hidden_size), jnp.float32,
                              -bound_ih, bound_ih)
    w_hh = jax.random.uniform(k3, (hidden_size, hidden_size), jnp.float32,
                              -bound_hh, bound_hh)
    b_hh = jax.random.uniform(k4, (1, hidden_size), jnp.float32,
                              -bound_hh, bound_hh)
    return w_ih, w_hh, b_ih, b_hh


if __name__ == "__main__":
    key = jax.random.PRNGKey(0)
    kx, kh, kp, ks = jax.random.split(key, 4)

    B = 2
    x = jax.random.normal(kx, (B, INPUT_SIZE), jnp.float32)
    h = jax.random.normal(kh, (B, HIDDEN_SIZE), jnp.float32)
    w_ih, w_hh, b_ih, b_hh = init_params(kp, INPUT_SIZE, HIDDEN_SIZE)
    w_ih_p, w_hh_p, b_p = pad_params(w_ih, w_hh, b_ih, b_hh)

    # --- single-step cell (matches the PyTorch module's forward) ------------
    out = rnn_cell(x, h, w_ih_p, w_hh_p, b_p)
    jax.block_until_ready(out)

    ref = jnp.tanh(x @ w_ih + b_ih + h @ w_hh + b_hh)
    assert out.shape == (B, HIDDEN_SIZE)
    assert jnp.allclose(out, ref, atol=1e-4, rtol=1e-4)

    # --- fused time loop: T steps of the same cell in ONE pallas_call -------
    T = 8
    x_seq = jax.random.normal(ks, (T, B, INPUT_SIZE), jnp.float32)
    seq_out = rnn_sequence(x_seq, h, w_ih_p, w_hh_p, b_p)
    jax.block_until_ready(seq_out)

    def ref_step(hc, xt):
        hn = jnp.tanh(xt @ w_ih + b_ih + hc @ w_hh + b_hh)
        return hn, hn

    _, ref_seq = jax.lax.scan(ref_step, h, x_seq)
    assert seq_out.shape == (T, B, HIDDEN_SIZE)
    # recurrence amplifies tiny accumulation-order differences -> looser tol
    assert jnp.allclose(seq_out, ref_seq, atol=1e-3, rtol=1e-3)

    print("KERNEL_OK")
</pallas_src>

<mosaic_0001>
module attributes {stable_mosaic.version = 11 : i64} {
  func.func @rnn_cell_kernel(%arg0: memref<8x8xf32, #tpu.memory_space<vmem>>, %arg1: memref<8x128xf32, #tpu.memory_space<vmem>>, %arg2: memref<8x128xf32, #tpu.memory_space<vmem>>, %arg3: memref<128x128xf32, #tpu.memory_space<vmem>>, %arg4: memref<1x128xf32, #tpu.memory_space<vmem>>, %arg5: memref<8x128xf32, #tpu.memory_space<vmem>>) attributes {dimension_semantics = [], scalar_prefetch = 0 : i64, scratch_operands = 0 : i64, tpu.core_type = #tpu.core_type<tc>} {
    %c0 = arith.constant 0 : index
    %c0_0 = arith.constant 0 : index
    %0 = vector.load %arg0[%c0, %c0_0] : memref<8x8xf32, #tpu.memory_space<vmem>>, vector<8x8xf32>
    %c0_1 = arith.constant 0 : index
    %c0_2 = arith.constant 0 : index
    %1 = vector.load %arg2[%c0_1, %c0_2] : memref<8x128xf32, #tpu.memory_space<vmem>>, vector<8x128xf32>
    %cst = arith.constant dense<0.000000e+00> : vector<8x128xf32>
    %2 = tpu.matmul %0, %1, %cst {dimension_numbers = #tpu.dot_dimension_numbers<[1], [0], [0], [1], [0, 0, 1, 1], [], []>} : vector<8x8xf32>, vector<8x128xf32>, vector<8x128xf32> -> vector<8x128xf32>
    %c0_3 = arith.constant 0 : index
    %c0_4 = arith.constant 0 : index
    %3 = vector.load %arg1[%c0_3, %c0_4] : memref<8x128xf32, #tpu.memory_space<vmem>>, vector<8x128xf32>
    %c0_5 = arith.constant 0 : index
    %c0_6 = arith.constant 0 : index
    %4 = vector.load %arg3[%c0_5, %c0_6] : memref<128x128xf32, #tpu.memory_space<vmem>>, vector<128x128xf32>
    %cst_7 = arith.constant dense<0.000000e+00> : vector<8x128xf32>
    %5 = tpu.matmul %3, %4, %cst_7 {dimension_numbers = #tpu.dot_dimension_numbers<[1], [0], [0], [1], [0, 0, 1, 1], [], []>} : vector<8x128xf32>, vector<128x128xf32>, vector<8x128xf32> -> vector<8x128xf32>
    %6 = arith.addf %2, %5 : vector<8x128xf32>
    %c0_8 = arith.constant 0 : index
    %c0_9 = arith.constant 0 : index
    %7 = vector.load %arg4[%c0_8, %c0_9] : memref<1x128xf32, #tpu.memory_space<vmem>>, vector<1x128xf32>
    %8 = vector.broadcast %7 : vector<1x128xf32> to vector<8x128xf32>
    %9 = arith.addf %6, %8 : vector<8x128xf32>
    %10 = math.tanh %9 : vector<8x128xf32>
    %c0_10 = arith.constant 0 : index
    %c0_11 = arith.constant 0 : index
    %11 = vector.load %arg5[%c0_10, %c0_11] : memref<8x128xf32, #tpu.memory_space<vmem>>, vector<8x128xf32>
    tpu.vector_store %arg5[%c0_10, %c0_11], %10 {strides = array<i32>} : memref<8x128xf32, #tpu.memory_space<vmem>>, vector<8x128xf32>,
    return
  }
}

</mosaic_0001>

<llo_original>
// kernel: tpu_custom_call.1
$region0: #{tpu_custom_call.1}
  #allocation0 [shape = 'u32[]', space=smem, size = 0x4, offset = 0x4, fixed_abs, tag = 'smem constant byte address 0x4 - core index']
  #allocation1 [shape = 'u32[72,128]{1,0:T(1,128)}', space=vmem, size = 0x9000, scoped, tag = 'internal scratch']
  %s0 = inlined_call_operand.hbm [shape: f32[8,8], index: 0, kind: input, shape index: {}]
  %s1 = inlined_call_operand.hbm [shape: f32[8,128], index: 1, kind: input, shape index: {}]
  %s2 = inlined_call_operand.hbm [shape: f32[8,128], index: 2, kind: input, shape index: {}]
  %s3 = inlined_call_operand.hbm [shape: f32[128,128], index: 3, kind: input, shape index: {}]
  %s4 = inlined_call_operand.vmem [shape: f32[1,128], index: 4, kind: input, shape index: {}]
  %s5 = inlined_call_operand.hbm [shape: f32[8,128], index: 5, kind: output, shape index: {}]
  %s6 = sld [smem:[#allocation0]]
  $region46: #{tpu_custom_call.1} parent=0
    _
  %s8 = ssub.s32 1, %s6
  %s9 = scalar_select 0, %s8, %s6
  $region1: #{tpu_custom_call.1} parent=0
    #allocation2 [shape = 'u8[4096]{0}', space=vmem, size = 0x1000, scoped, tag = 'input window, operand 0, single buffered']
    #allocation3 [shape = 's32[1]{0}', space=sflag, size = 0x4, scoped, tag = 'scoped memory for tpu_custom_call.1']
    #allocation4 [shape = 's32[1]{0}', space=sflag, size = 0x4, scoped, tag = 'scoped memory for tpu_custom_call.1']
    #allocation5 [shape = 'u8[4096]{0}', space=vmem, size = 0x1000, scoped, tag = 'input window, operand 1, single buffered']
    #allocation6 [shape = 's32[1]{0}', space=sflag, size = 0x4, scoped, tag = 'scoped memory for tpu_custom_call.1']
    #allocation7 [shape = 'u8[4096]{0}', space=vmem, size = 0x1000, scoped, tag = 'input window, operand 2, single buffered']
    #allocation8 [shape = 'u8[65536]{0}', space=vmem, size = 0x10000, scoped, tag = 'input window, operand 3, single buffered']
    #allocation9 [shape = 's32[1]{0}', space=sflag, size = 0x4, scoped, tag = 'scoped memory for tpu_custom_call.1']
    #allocation10 [shape = 'u8[4096]{0}', space=vmem, size = 0x1000, scoped, tag = 'output window, operand 0, single buffered']
    %10 = vsyncpa [#allocation3], 0
    %11 = vsyncpa [#allocation6], 0
    %12 = vsyncpa [#allocation9], 0
    %13 = vsyncpa [#allocation4], 0
    // Predicated region
    $region2: #{tpu_custom_call.1} parent=1 // pred_check
      _
    $region3: #{tpu_custom_call.1} parent=1 // pred_check_branch
      %15 = sbr.rel (0) target = $region5
    $region4: #{tpu_custom_call.1} parent=1 // pred_region
      %17 = vsyncadd [#allocation3], 0
      %s19 = sshll.u32 %s0, 4
      %s20 = int_to_ptr.hbm [resolvable:$true] %s19
      %s21 = sshll.u32 [#allocation2], 4
      %s22 = int_to_ptr.vmem [resolvable:$true] %s21
      %24 = dma.hbm_to_vmem [thread:$0]  %s20, 128, %s22, [#allocation3]
    $region5: #{tpu_custom_call.1} parent=1 // pred_fallthru
      _
    // Predicated region
    $region6: #{tpu_custom_call.1} parent=1 // pred_check
      _
    $region7: #{tpu_custom_call.1} parent=1 // pred_check_branch
      %26 = sbr.rel (0) target = $region9
    $region8: #{tpu_custom_call.1} parent=1 // pred_region
      %28 = vsyncadd [#allocation6], 0
      %s30 = sshll.u32 %s1, 4
      %s31 = int_to_ptr.hbm [resolvable:$true] %s30
      %s32 = sshll.u32 [#allocation5], 4
      %s33 = int_to_ptr.vmem [resolvable:$true] %s32
      %35 = dma.hbm_to_vmem [thread:$0]  %s31, 128, %s33, [#allocation6]
    $region9: #{tpu_custom_call.1} parent=1 // pred_fallthru
      _
    // Predicated region
    $region10: #{tpu_custom_call.1} parent=1 // pred_check
      _
    $region11: #{tpu_custom_call.1} parent=1 // pred_check_branch
      %37 = sbr.rel (0) target = $region13
    $region12: #{tpu_custom_call.1} parent=1 // pred_region
      %39 = vsyncadd [#allocation6], 0
      %s41 = sshll.u32 %s2, 4
      %s42 = int_to_ptr.hbm [resolvable:$true] %s41
      %s43 = sshll.u32 [#allocation7], 4
      %s44 = int_to_ptr.vmem [resolvable:$true] %s43
      %46 = dma.hbm_to_vmem [thread:$0]  %s42, 128, %s44, [#allocation6]
    $region13: #{tpu_custom_call.1} parent=1 // pred_fallthru
      _
    // Predicated region
    $region14: #{tpu_custom_call.1} parent=1 // pred_check
      _
    $region15: #{tpu_custom_call.1} parent=1 // pred_check_branch
      %48 = sbr.rel (0) target = $region17
    $region16: #{tpu_custom_call.1} parent=1 // pred_region
      %50 = vsyncadd [#allocation9], 0
      %s51 = sshll.u32 %s3, 4
      %s52 = int_to_ptr.hbm [resolvable:$true] %s51
      %s53 = sshll.u32 [#allocation8], 4
      %s54 = int_to_ptr.vmem [resolvable:$true] %s53
      %59 = dma.hbm_to_vmem [thread:$0]  %s52, 2048, %s54, [#allocation9], 128, 128, 8
    $region17: #{tpu_custom_call.1} parent=1 // pred_fallthru
      _
    // Predicated region
    $region18: #{tpu_custom_call.1} parent=1 // pred_check
      _
    $region19: #{tpu_custom_call.1} parent=1 // pred_check_branch
      %61 = sbr.rel (0) target = $region21
    $region20: #{tpu_custom_call.1} parent=1 // pred_region
      _
    $region21: #{tpu_custom_call.1} parent=1 // pred_fallthru
      _
    // Predicated region
    $region22: #{tpu_custom_call.1} parent=1 // pred_check
      _
    $region23: #{tpu_custom_call.1} parent=1 // pred_check_branch
      %63 = sbr.rel (0) target = $region25
    $region24: #{tpu_custom_call.1} parent=1 // pred_region
      %65 = dma.done [#allocation3], 128
    $region25: #{tpu_custom_call.1} parent=1 // pred_fallthru
      _
    // Predicated region
    $region26: #{tpu_custom_call.1} parent=1 // pred_check
      _
    $region27: #{tpu_custom_call.1} parent=1 // pred_check_branch
      %67 = sbr.rel (0) target = $region29
    $region28: #{tpu_custom_call.1} parent=1 // pred_region
      %69 = dma.done [#allocation6], 128
    $region29: #{tpu_custom_call.1} parent=1 // pred_fallthru
      _
    // Predicated region
    $region30: #{tpu_custom_call.1} parent=1 // pred_check
      _
    $region31: #{tpu_custom_call.1} parent=1 // pred_check_branch
      %71 = sbr.rel (0) target = $region33
    $region32: #{tpu_custom_call.1} parent=1 // pred_region
      %73 = dma.done [#allocation6], 128
    $region33: #{tpu_custom_call.1} parent=1 // pred_fallthru
      _
    // Predicated region
    $region34: #{tpu_custom_call.1} parent=1 // pred_check
      _
    $region35: #{tpu_custom_call.1} parent=1 // pred_check_branch
      %75 = sbr.rel (0) target = $region37
    $region36: #{tpu_custom_call.1} parent=1 // pred_region
      %77 = dma.done [#allocation9], 2048
    $region37: #{tpu_custom_call.1} parent=1 // pred_fallthru
      _
    %v78 = vld [vmem:[#allocation2] sm:$0xff]
    %v79 = vld [vmem:[#allocation7] sm:$0xff]
    %v80 = vld [vmem:[#allocation5] sm:$0xff]
    %v81 = vld [vmem:[#allocation8] sm:$0xff]
    %v82 = vld [vmem:[#allocation8 + $0x8] sm:$0xff]
    %v83 = vld [vmem:[#allocation8 + $0x10] sm:$0xff]
    %v84 = vld [vmem:[#allocation8 + $0x18] sm:$0xff]
    %v85 = vld [vmem:[#allocation8 + $0x20] sm:$0xff]
    %v86 = vld [vmem:[#allocation8 + $0x28] sm:$0xff]
    %v87 = vld [vmem:[#allocation8 + $0x30] sm:$0xff]
    %v88 = vld [vmem:[#allocation8 + $0x38] sm:$0xff]
    %v89 = vld [vmem:[#allocation8 + $0x40] sm:$0xff]
    %v90 = vld [vmem:[#allocation8 + $0x48] sm:$0xff]
    %v91 = vld [vmem:[#allocation8 + $0x50] sm:$0xff]
    %v92 = vld [vmem:[#allocation8 + $0x58] sm:$0xff]
    %v93 = vld [vmem:[#allocation8 + $0x60] sm:$0xff]
    %v94 = vld [vmem:[#allocation8 + $0x68] sm:$0xff]
    %v95 = vld [vmem:[#allocation8 + $0x70] sm:$0xff]
    %v96 = vld [vmem:[#allocation8 + $0x78] sm:$0xff]
    %97 = vmatpush.msra.mxu0 %v96
    %98 = vmatpush.msra.mxu0 %v95
    %99 = vmatpush.msra.mxu0 %v94
    %100 = vmatpush.msra.mxu0 %v93
    %101 = vmatpush.msra.mxu0 %v92
    %102 = vmatpush.msra.mxu0 %v91
    %103 = vmatpush.msra.mxu0 %v90
    %104 = vmatpush.msra.mxu0 %v89
    %105 = vmatpush.msra.mxu0 %v88
    %106 = vmatpush.msra.mxu0 %v87
    %107 = vmatpush.msra.mxu0 %v86
    %108 = vmatpush.msra.mxu0 %v85
    %109 = vmatpush.msra.mxu0 %v84
    %110 = vmatpush.msra.mxu0 %v83
    %111 = vmatpush.msra.mxu0 %v82
    %112 = vmatpush.msra.mxu0 %v81
    %113 = vmatmul.f32.gmra.mxu0 %v80
    %v114 = vpop.f32.mrf.mxu0
    %v115 = vadd.f32 0.0, %v114
    %116 = vdwg.mxu0
    %vm117 = vcmask 64512
    %v119 = vsel %vm117, %v78, 0
    %121 = vmatpush.msra.mxu0 0.0
    %122 = vmatpush.msra.mxu0 0.0
    %123 = vmatpush.msra.mxu0 0.0
    %124 = vmatpush.msra.mxu0 0.0
    %125 = vmatpush.msra.mxu0 0.0
    %126 = vmatpush.msra.mxu0 0.0
    %127 = vmatpush.msra.mxu0 0.0
    %128 = vmatpush.msra.mxu0 0.0
    %129 = vmatpush.msra.mxu0 0.0
    %130 = vmatpush.msra.mxu0 0.0
    %131 = vmatpush.msra.mxu0 0.0
    %132 = vmatpush.msra.mxu0 0.0
    %133 = vmatpush.msra.mxu0 0.0
    %134 = vmatpush.msra.mxu0 0.0
    %135 = vmatpush.msra.mxu0 0.0
    %136 = vmatpush.msra.mxu0 %v79
    %137 = vmatmul.f32.gmra.mxu0 %v119
    %v138 = vpop.f32.mrf.mxu0
    %v139 = vadd.f32 %v115, %v138
    %140 = vdwg.mxu0
    %v141 = vld [vmem:[%s4] sm:$0x1]
    %v143 = vperm.slane %v141, 0
    %v145 = vadd.f32 %v139, %v143
    %v146 = vtanh.pop %v145
    %147 = vst [vmem:[#allocation10] sm:$0xff] %v146
    // Predicated region
    $region38: #{tpu_custom_call.1} parent=1 // pred_check
      _
    $region39: #{tpu_custom_call.1} parent=1 // pred_check_branch
      %149 = sbr.rel (0) target = $region41
    $region40: #{tpu_custom_call.1} parent=1 // pred_region
      %151 = vsyncadd [#allocation4], 0
      %s153 = sshll.u32 [#allocation10], 4
      %s154 = int_to_ptr.vmem [resolvable:$true] %s153
      %s155 = sshll.u32 %s5, 4
      %s156 = int_to_ptr.hbm [resolvable:$true] %s155
      %158 = dma.vmem_to_hbm [thread:$0]  %s154, 128, %s156, [#allocation4]
    $region41: #{tpu_custom_call.1} parent=1 // pred_fallthru
      _
    // Predicated region
    $region42: #{tpu_custom_call.1} parent=1 // pred_check
      _
    $region43: #{tpu_custom_call.1} parent=1 // pred_check_branch
      %160 = sbr.rel (0) target = $region45
    $region44: #{tpu_custom_call.1} parent=1 // pred_region
      %162 = dma.done [#allocation4], 128
    $region45: #{tpu_custom_call.1} parent=1 // pred_fallthru
      _
    %163 = vsyncpa [#allocation3], 1
    %164 = vsyncpa [#allocation6], 1
    %165 = vsyncpa [#allocation9], 1
    %166 = vsyncpa [#allocation4], 1

</llo_original>
